<compile_context>
chip_gen: v5e
topology: v5e:2x2
jax: 0.10.0
libtpu: 0.0.40
codegen_flags: <defaults>
</compile_context>

<pallas_src>
import functools

import jax
import jax.numpy as jnp
from jax import lax
from jax.experimental import pallas as pl
from jax.experimental.pallas import tpu as pltpu

embedding_dim = 10
hidden_dim = 128
LANE = 128

raw_text = ('We are about to study the idea of a computational process.\n'
            'Computational processes are abstract beings that inhabit computers.\n'
            'As they evolve, processes manipulate other abstract things called data.\n'
            'The evolution of a process is directed by a pattern of rules\n'
            'called a program. People create programs to direct processes. In effect,\n'
            'we conjure the spirits of the computer with our spells.').split()

vocab = set(raw_text)
vocab_size = len(vocab)


def _pad_to(n, m):
    return ((n + m - 1) // m) * m


def cbow_kernel(idx_ref, w1f_ref, b1_ref, w2_ref, b2_ref, out_ref):
    vocab_pad = w1f_ref.shape[0]
    mxu_dtype = w1f_ref.dtype

    # --- embedding-sum as one-hot counts (4 VPU compares on lane-dense vregs) ---
    iota = lax.broadcasted_iota(jnp.int32, (1, vocab_pad), 1)
    counts = jnp.zeros((1, vocab_pad), jnp.float32)
    for i in range(idx_ref.shape[0]):                 # static unroll (4 compares)
        counts = counts + (iota == idx_ref[i]).astype(jnp.float32)

    # --- fused proj: relu(counts @ (E @ W1) + b1), f32 accumulation ---
    h = jnp.dot(counts.astype(mxu_dtype), w1f_ref[...],
                preferred_element_type=jnp.float32) + b1_ref[...]
    h = jnp.maximum(h, 0.0)

    # --- output: h @ W2 + b2 (padded vocab columns carry a -1e30 f32 bias) ---
    logits = jnp.dot(h.astype(mxu_dtype), w2_ref[...],
                     preferred_element_type=jnp.float32) + b2_ref[...]

    # --- log_softmax over last dim (f32, stable; padded lanes exp() -> 0) ---
    m = jnp.max(logits, axis=-1, keepdims=True)
    z = logits - m
    lse = jnp.log(jnp.sum(jnp.exp(z), axis=-1, keepdims=True))
    out_ref[...] = z - lse


def prepare_params(emb_table, w1, b1, w2, b2, mxu_dtype=jnp.float32):
    """One-time init: pad to lane-dense shapes and fuse emb_table @ W1 offline."""
    vs, ed = emb_table.shape
    hd = w1.shape[1]
    vocab_pad = _pad_to(vs, LANE)

    # Fused first layer: (counts @ E) @ W1 == counts @ (E @ W1).
    w1f = jnp.zeros((vocab_pad, hd), jnp.float32).at[:vs, :].set(
        emb_table.astype(jnp.float32) @ w1.astype(jnp.float32))
    w2_p = jnp.zeros((hd, vocab_pad), jnp.float32).at[:, :vs].set(w2)
    # -1e30 on padded logits keeps the log-softmax normalizer exact; stays f32.
    b2_p = jnp.full((1, vocab_pad), -1e30, jnp.float32).at[:, :vs].set(b2)

    return dict(
        w1f=jax.device_put(w1f.astype(mxu_dtype)),
        b1=jax.device_put(b1.reshape(1, hd).astype(jnp.float32)),
        w2=jax.device_put(w2_p.astype(mxu_dtype)),
        b2=jax.device_put(b2_p),
        vocab_size=vs,
    )


@functools.partial(jax.jit, static_argnames=("vocab_size",))
def _cbow_call(indices, w1f, b1, w2, b2, *, vocab_size):
    vocab_pad, hd = w1f.shape
    itemsize = jnp.dtype(w1f.dtype).itemsize
    cost = pl.CostEstimate(
        flops=2 * vocab_pad * hd + 2 * hd * vocab_pad,
        transcendentals=vocab_pad,
        bytes_accessed=(w1f.size + w2.size) * itemsize
        + (b1.size + b2.size + vocab_pad) * 4,
    )
    out = pl.pallas_call(
        cbow_kernel,
        out_shape=jax.ShapeDtypeStruct((1, vocab_pad), jnp.float32),
        in_specs=[
            pl.BlockSpec(memory_space=pltpu.MemorySpace.SMEM),   # context indices (4,)
            pl.BlockSpec(memory_space=pltpu.MemorySpace.VMEM),   # fused W1' (vocab_pad, 128)
            pl.BlockSpec(memory_space=pltpu.MemorySpace.VMEM),   # b1 (1, 128)
            pl.BlockSpec(memory_space=pltpu.MemorySpace.VMEM),   # W2 (128, vocab_pad)
            pl.BlockSpec(memory_space=pltpu.MemorySpace.VMEM),   # b2 (1, vocab_pad)
        ],
        out_specs=pl.BlockSpec(memory_space=pltpu.MemorySpace.VMEM),
        cost_estimate=cost,
    )(indices.astype(jnp.int32), w1f, b1, w2, b2)
    return out[:, :vocab_size]


def cbow_forward(indices, params):
    return _cbow_call(indices, params["w1f"], params["b1"], params["w2"],
                      params["b2"], vocab_size=params["vocab_size"])


def reference_forward(indices, emb_table, w1, b1, w2, b2):
    embeds = jnp.sum(emb_table[indices], axis=0).reshape(1, -1)
    h = jax.nn.relu(embeds @ w1 + b1)
    logits = h @ w2 + b2
    return jax.nn.log_softmax(logits, axis=-1)


if __name__ == "__main__":
    key = jax.random.PRNGKey(0)
    k_emb, k_w1, k_b1, k_w2, k_b2, k_idx = jax.random.split(key, 6)

    # Deterministic parameter init (shapes from CBOW.__init__).
    emb_table = jax.random.normal(k_emb, (vocab_size, embedding_dim), jnp.float32)
    # nn.Linear(embedding_dim, 128): weight (128, emb_dim) -> pre-transposed (emb_dim, 128)
    bound1 = 1.0 / jnp.sqrt(embedding_dim)
    w1 = jax.random.uniform(k_w1, (embedding_dim, hidden_dim), jnp.float32, -bound1, bound1)
    b1 = jax.random.uniform(k_b1, (1, hidden_dim), jnp.float32, -bound1, bound1)
    # nn.Linear(128, vocab_size): weight (vocab, 128) -> pre-transposed (128, vocab)
    bound2 = 1.0 / jnp.sqrt(hidden_dim)
    w2 = jax.random.uniform(k_w2, (hidden_dim, vocab_size), jnp.float32, -bound2, bound2)
    b2 = jax.random.uniform(k_b2, (1, vocab_size), jnp.float32, -bound2, bound2)

    # CBOW context window of 4 word indices (2 left + 2 right), deterministic.
    context_idx = jax.random.randint(k_idx, (4,), 0, vocab_size, dtype=jnp.int32)

    ref = reference_forward(context_idx, emb_table, w1, b1, w2, b2)

    # f32 MXU path (exact vs reference).
    params_f32 = prepare_params(emb_table, w1, b1, w2, b2, mxu_dtype=jnp.float32)
    out = jax.block_until_ready(cbow_forward(context_idx, params_f32))
    assert out.shape == (1, vocab_size)
    assert jnp.allclose(out, ref, atol=1e-5, rtol=1e-5)

    # bf16-weight MXU path (halved weight DMA on v6e/v7x; f32 elementwise/softmax).
    params_bf16 = prepare_params(emb_table, w1, b1, w2, b2, mxu_dtype=jnp.bfloat16)
    out_bf16 = jax.block_until_ready(cbow_forward(context_idx, params_bf16))
    assert out_bf16.shape == (1, vocab_size)
    assert jnp.allclose(out_bf16, ref, atol=5e-2, rtol=5e-2)

    print("KERNEL_OK")
</pallas_src>

<mosaic_0001>
module attributes {stable_mosaic.version = 11 : i64} {
  func.func @cbow_kernel(%arg0: memref<4xi32, #tpu.memory_space<smem>>, %arg1: memref<128x128xf32, #tpu.memory_space<vmem>>, %arg2: memref<1x128xf32, #tpu.memory_space<vmem>>, %arg3: memref<128x128xf32, #tpu.memory_space<vmem>>, %arg4: memref<1x128xf32, #tpu.memory_space<vmem>>, %arg5: memref<1x128xf32, #tpu.memory_space<vmem>>) attributes {dimension_semantics = [], scalar_prefetch = 0 : i64, scratch_operands = 0 : i64, tpu.core_type = #tpu.core_type<tc>} {
    %0 = tpu.iota {dimensions = array<i32: 1>} : vector<1x128xi32>
    %cst = arith.constant 0.000000e+00 : f32
    %1 = vector.broadcast %cst : f32 to vector<1x128xf32>
    %c0 = arith.constant 0 : index
    %2 = memref.load %arg0[%c0] : memref<4xi32, #tpu.memory_space<smem>>
    %3 = vector.broadcast %2 : i32 to vector<1x128xi32>
    %4 = arith.cmpi eq, %0, %3 : vector<1x128xi32>
    %5 = arith.extui %4 : vector<1x128xi1> to vector<1x128xi32>
    %6 = arith.sitofp %5 : vector<1x128xi32> to vector<1x128xf32>
    %7 = arith.addf %1, %6 : vector<1x128xf32>
    %c1 = arith.constant 1 : index
    %8 = memref.load %arg0[%c1] : memref<4xi32, #tpu.memory_space<smem>>
    %9 = vector.broadcast %8 : i32 to vector<1x128xi32>
    %10 = arith.cmpi eq, %0, %9 : vector<1x128xi32>
    %11 = arith.extui %10 : vector<1x128xi1> to vector<1x128xi32>
    %12 = arith.sitofp %11 : vector<1x128xi32> to vector<1x128xf32>
    %13 = arith.addf %7, %12 : vector<1x128xf32>
    %c2 = arith.constant 2 : index
    %14 = memref.load %arg0[%c2] : memref<4xi32, #tpu.memory_space<smem>>
    %15 = vector.broadcast %14 : i32 to vector<1x128xi32>
    %16 = arith.cmpi eq, %0, %15 : vector<1x128xi32>
    %17 = arith.extui %16 : vector<1x128xi1> to vector<1x128xi32>
    %18 = arith.sitofp %17 : vector<1x128xi32> to vector<1x128xf32>
    %19 = arith.addf %13, %18 : vector<1x128xf32>
    %c3 = arith.constant 3 : index
    %20 = memref.load %arg0[%c3] : memref<4xi32, #tpu.memory_space<smem>>
    %21 = vector.broadcast %20 : i32 to vector<1x128xi32>
    %22 = arith.cmpi eq, %0, %21 : vector<1x128xi32>
    %23 = arith.extui %22 : vector<1x128xi1> to vector<1x128xi32>
    %24 = arith.sitofp %23 : vector<1x128xi32> to vector<1x128xf32>
    %25 = arith.addf %19, %24 : vector<1x128xf32>
    %c0_0 = arith.constant 0 : index
    %c0_1 = arith.constant 0 : index
    %26 = vector.load %arg1[%c0_0, %c0_1] : memref<128x128xf32, #tpu.memory_space<vmem>>, vector<128x128xf32>
    %cst_2 = arith.constant dense<0.000000e+00> : vector<1x128xf32>
    %27 = tpu.matmul %25, %26, %cst_2 {dimension_numbers = #tpu.dot_dimension_numbers<[1], [0], [0], [1], [0, 0, 1, 1], [], []>} : vector<1x128xf32>, vector<128x128xf32>, vector<1x128xf32> -> vector<1x128xf32>
    %c0_3 = arith.constant 0 : index
    %c0_4 = arith.constant 0 : index
    %28 = vector.load %arg2[%c0_3, %c0_4] : memref<1x128xf32, #tpu.memory_space<vmem>>, vector<1x128xf32>
    %29 = arith.addf %27, %28 : vector<1x128xf32>
    %cst_5 = arith.constant 0.000000e+00 : f32
    %30 = vector.broadcast %cst_5 : f32 to vector<1x128xf32>
    %31 = arith.maximumf %29, %30 : vector<1x128xf32>
    %c0_6 = arith.constant 0 : index
    %c0_7 = arith.constant 0 : index
    %32 = vector.load %arg3[%c0_6, %c0_7] : memref<128x128xf32, #tpu.memory_space<vmem>>, vector<128x128xf32>
    %cst_8 = arith.constant dense<0.000000e+00> : vector<1x128xf32>
    %33 = tpu.matmul %31, %32, %cst_8 {dimension_numbers = #tpu.dot_dimension_numbers<[1], [0], [0], [1], [0, 0, 1, 1], [], []>} : vector<1x128xf32>, vector<128x128xf32>, vector<1x128xf32> -> vector<1x128xf32>
    %c0_9 = arith.constant 0 : index
    %c0_10 = arith.constant 0 : index
    %34 = vector.load %arg4[%c0_9, %c0_10] : memref<1x128xf32, #tpu.memory_space<vmem>>, vector<1x128xf32>
    %35 = arith.addf %33, %34 : vector<1x128xf32>
    %cst_11 = arith.constant dense<0xFF800000> : vector<1xf32>
    %36 = vector.multi_reduction <maximumf>, %35, %cst_11 [1] : vector<1x128xf32> to vector<1xf32>
    %37 = vector.shape_cast %36 : vector<1xf32> to vector<1x1xf32>
    %38 = vector.broadcast %37 : vector<1x1xf32> to vector<1x128xf32>
    %39 = arith.subf %35, %38 : vector<1x128xf32>
    %40 = math.exp %39 : vector<1x128xf32>
    %cst_12 = arith.constant dense<0.000000e+00> : vector<1xf32>
    %41 = vector.multi_reduction <add>, %40, %cst_12 [1] : vector<1x128xf32> to vector<1xf32>
    %42 = vector.shape_cast %41 : vector<1xf32> to vector<1x1xf32>
    %43 = math.log %42 : vector<1x1xf32>
    %44 = vector.broadcast %43 : vector<1x1xf32> to vector<1x128xf32>
    %45 = arith.subf %39, %44 : vector<1x128xf32>
    %c0_13 = arith.constant 0 : index
    %c0_14 = arith.constant 0 : index
    %46 = vector.load %arg5[%c0_13, %c0_14] : memref<1x128xf32, #tpu.memory_space<vmem>>, vector<1x128xf32>
    tpu.vector_store %arg5[%c0_13, %c0_14], %45 {strides = array<i32>} : memref<1x128xf32, #tpu.memory_space<vmem>>, vector<1x128xf32>,
    return
  }
}

</mosaic_0001>

<llo_original>
// kernel: _cbow_call.1
$region0: #{_cbow_call.1}
  #allocation0 [shape = 'u32[]', space=smem, size = 0x4, offset = 0x4, fixed_abs, tag = 'smem constant byte address 0x4 - core index']
  #allocation1 [shape = 'u32[72,128]{1,0:T(1,128)}', space=vmem, size = 0x9000, scoped, tag = 'internal scratch']
  %s0 = inlined_call_operand.hbm [shape: s32[4], index: 0, kind: input, shape index: {}]
  %s1 = inlined_call_operand.hbm [shape: f32[128,128], index: 1, kind: input, shape index: {}]
  %s2 = inlined_call_operand.vmem [shape: f32[1,128], index: 2, kind: input, shape index: {}]
  %s3 = inlined_call_operand.hbm [shape: f32[128,128], index: 3, kind: input, shape index: {}]
  %s4 = inlined_call_operand.vmem [shape: f32[1,128], index: 4, kind: input, shape index: {}]
  %s5 = inlined_call_operand.hbm [shape: f32[1,128], index: 5, kind: output, shape index: {}]
  %s6 = sld [smem:[#allocation0]]
  $region42: #{_cbow_call.1} parent=0
    _
  %s8 = ssub.s32 1, %s6
  %s9 = scalar_select 0, %s8, %s6
  $region1: #{_cbow_call.1} parent=0
    #allocation2 [shape = 'u8[512]{0}', space=smem, size = 0x200, scoped, tag = 'input window, operand 0, single buffered']
    #allocation3 [shape = 's32[1]{0}', space=sflag, size = 0x4, scoped, tag = 'scoped memory for _cbow_call.1']
    #allocation4 [shape = 's32[1]{0}', space=sflag, size = 0x4, scoped, tag = 'scoped memory for _cbow_call.1']
    #allocation5 [shape = 's32[1]{0}', space=sflag, size = 0x4, scoped, tag = 'scoped memory for _cbow_call.1']
    #allocation6 [shape = 'u8[65536]{0}', space=vmem, size = 0x10000, scoped, tag = 'input window, operand 1, single buffered']
    #allocation7 [shape = 'u8[65536]{0}', space=vmem, size = 0x10000, scoped, tag = 'input window, operand 3, single buffered']
    #allocation8 [shape = 's32[1]{0}', space=sflag, size = 0x4, scoped, tag = 'scoped memory for _cbow_call.1']
    #allocation9 [shape = 'u8[512]{0}', space=vmem, size = 0x400, scoped, tag = 'output window, operand 0, single buffered']
    %10 = vsyncpa [#allocation5], 0
    %11 = vsyncpa [#allocation3], 0
    %12 = vsyncpa [#allocation8], 0
    %13 = vsyncpa [#allocation4], 0
    // Predicated region
    $region2: #{_cbow_call.1} parent=1 // pred_check
      _
    $region3: #{_cbow_call.1} parent=1 // pred_check_branch
      %15 = sbr.rel (0) target = $region5
    $region4: #{_cbow_call.1} parent=1 // pred_region
      %17 = vsyncadd [#allocation5], 0
      %s19 = sshll.u32 %s0, 4
      %s20 = int_to_ptr.hbm [resolvable:$true] %s19
      %22 = dma.hbm_to_smem %s20, 16, [#allocation2], [#allocation5]
    $region5: #{_cbow_call.1} parent=1 // pred_fallthru
      _
    // Predicated region
    $region6: #{_cbow_call.1} parent=1 // pred_check
      _
    $region7: #{_cbow_call.1} parent=1 // pred_check_branch
      %24 = sbr.rel (0) target = $region9
    $region8: #{_cbow_call.1} parent=1 // pred_region
      %26 = vsyncadd [#allocation3], 0
      %s27 = sshll.u32 %s1, 4
      %s28 = int_to_ptr.hbm [resolvable:$true] %s27
      %s29 = sshll.u32 [#allocation6], 4
      %s30 = int_to_ptr.vmem [resolvable:$true] %s29
      %35 = dma.hbm_to_vmem [thread:$0]  %s28, 2048, %s30, [#allocation3], 128, 128, 8
    $region9: #{_cbow_call.1} parent=1 // pred_fallthru
      _
    // Predicated region
    $region10: #{_cbow_call.1} parent=1 // pred_check
      _
    $region11: #{_cbow_call.1} parent=1 // pred_check_branch
      %37 = sbr.rel (0) target = $region13
    $region12: #{_cbow_call.1} parent=1 // pred_region
      _
    $region13: #{_cbow_call.1} parent=1 // pred_fallthru
      _
    // Predicated region
    $region14: #{_cbow_call.1} parent=1 // pred_check
      _
    $region15: #{_cbow_call.1} parent=1 // pred_check_branch
      %39 = sbr.rel (0) target = $region17
    $region16: #{_cbow_call.1} parent=1 // pred_region
      %41 = vsyncadd [#allocation8], 0
      %s42 = sshll.u32 %s3, 4
      %s43 = int_to_ptr.hbm [resolvable:$true] %s42
      %s44 = sshll.u32 [#allocation7], 4
      %s45 = int_to_ptr.vmem [resolvable:$true] %s44
      %50 = dma.hbm_to_vmem [thread:$0]  %s43, 2048, %s45, [#allocation8], 128, 128, 8
    $region17: #{_cbow_call.1} parent=1 // pred_fallthru
      _
    // Predicated region
    $region18: #{_cbow_call.1} parent=1 // pred_check
      _
    $region19: #{_cbow_call.1} parent=1 // pred_check_branch
      %52 = sbr.rel (0) target = $region21
    $region20: #{_cbow_call.1} parent=1 // pred_region
      _
    $region21: #{_cbow_call.1} parent=1 // pred_fallthru
      _
    // Predicated region
    $region22: #{_cbow_call.1} parent=1 // pred_check
      _
    $region23: #{_cbow_call.1} parent=1 // pred_check_branch
      %54 = sbr.rel (0) target = $region25
    $region24: #{_cbow_call.1} parent=1 // pred_region
      %56 = dma.done [#allocation5], 16
    $region25: #{_cbow_call.1} parent=1 // pred_fallthru
      _
    // Predicated region
    $region26: #{_cbow_call.1} parent=1 // pred_check
      _
    $region27: #{_cbow_call.1} parent=1 // pred_check_branch
      %58 = sbr.rel (0) target = $region29
    $region28: #{_cbow_call.1} parent=1 // pred_region
      %60 = dma.done [#allocation3], 2048
    $region29: #{_cbow_call.1} parent=1 // pred_fallthru
      _
    // Predicated region
    $region30: #{_cbow_call.1} parent=1 // pred_check
      _
    $region31: #{_cbow_call.1} parent=1 // pred_check_branch
      %62 = sbr.rel (0) target = $region33
    $region32: #{_cbow_call.1} parent=1 // pred_region
      %64 = dma.done [#allocation8], 2048
    $region33: #{_cbow_call.1} parent=1 // pred_fallthru
      _
    %65 = sfence
    %v66 = vlaneseq
    %v67 = vand.u32 %v66, 127
    %s68 = sld [smem:[#allocation2]]
    %v69 = vstv %s68
    %vm70 = vcmp.eq.s32.totalorder %v67, %v69
    %v71 = vsel %vm70, 1, 0
    %v72 = vcvt.s32.f32 %v71
    %v73 = vadd.f32 %v72, 0.0
    %s74 = sld [smem:[#allocation2 + $0x1]]
    %v75 = vstv %s74
    %vm76 = vcmp.eq.s32.totalorder %v67, %v75
    %v77 = vsel %vm76, 1, 0
    %v78 = vcvt.s32.f32 %v77
    %v79 = vadd.f32 %v73, %v78
    %s80 = sld [smem:[#allocation2 + $0x2]]
    %v81 = vstv %s80
    %vm82 = vcmp.eq.s32.totalorder %v67, %v81
    %v83 = vsel %vm82, 1, 0
    %v84 = vcvt.s32.f32 %v83
    %v85 = vadd.f32 %v79, %v84
    %s86 = sld [smem:[#allocation2 + $0x3]]
    %v87 = vstv %s86
    %vm88 = vcmp.eq.s32.totalorder %v67, %v87
    %v89 = vsel %vm88, 1, 0
    %v90 = vcvt.s32.f32 %v89
    %v91 = vadd.f32 %v85, %v90
    %v92 = vld [vmem:[#allocation6] sm:$0xff]
    %v93 = vld [vmem:[#allocation6 + $0x8] sm:$0xff]
    %v94 = vld [vmem:[#allocation6 + $0x10] sm:$0xff]
    %v95 = vld [vmem:[#allocation6 + $0x18] sm:$0xff]
    %v96 = vld [vmem:[#allocation6 + $0x20] sm:$0xff]
    %v97 = vld [vmem:[#allocation6 + $0x28] sm:$0xff]
    %v98 = vld [vmem:[#allocation6 + $0x30] sm:$0xff]
    %v99 = vld [vmem:[#allocation6 + $0x38] sm:$0xff]
    %v100 = vld [vmem:[#allocation6 + $0x40] sm:$0xff]
    %v101 = vld [vmem:[#allocation6 + $0x48] sm:$0xff]
    %v102 = vld [vmem:[#allocation6 + $0x50] sm:$0xff]
    %v103 = vld [vmem:[#allocation6 + $0x58] sm:$0xff]
    %v104 = vld [vmem:[#allocation6 + $0x60] sm:$0xff]
    %v105 = vld [vmem:[#allocation6 + $0x68] sm:$0xff]
    %v106 = vld [vmem:[#allocation6 + $0x70] sm:$0xff]
    %v107 = vld [vmem:[#allocation6 + $0x78] sm:$0xff]
    %v108 = vld [vmem:[%s2] sm:$0x1]
    %109 = vmatpush.msra.mxu0 %v107
    %110 = vmatpush.msra.mxu0 %v106
    %111 = vmatpush.msra.mxu0 %v105
    %112 = vmatpush.msra.mxu0 %v104
    %113 = vmatpush.msra.mxu0 %v103
    %114 = vmatpush.msra.mxu0 %v102
    %115 = vmatpush.msra.mxu0 %v101
    %116 = vmatpush.msra.mxu0 %v100
    %117 = vmatpush.msra.mxu0 %v99
    %118 = vmatpush.msra.mxu0 %v98
    %119 = vmatpush.msra.mxu0 %v97
    %120 = vmatpush.msra.mxu0 %v96
    %121 = vmatpush.msra.mxu0 %v95
    %122 = vmatpush.msra.mxu0 %v94
    %123 = vmatpush.msra.mxu0 %v93
    %124 = vmatpush.msra.mxu0 %v92
    %125 = vmatmul.f32.gmra.mxu0 %v91
    %v126 = vpop.f32.mrf.mxu0
    %v127 = vadd.f32 %v108, %v126
    %128 = vdwg.mxu0
    %v129 = vmax.f32 %v127, 0.0
    %v130 = vld [vmem:[#allocation7] sm:$0xff]
    %v131 = vld [vmem:[#allocation7 + $0x8] sm:$0xff]
    %v132 = vld [vmem:[#allocation7 + $0x10] sm:$0xff]
    %v133 = vld [vmem:[#allocation7 + $0x18] sm:$0xff]
    %v134 = vld [vmem:[#allocation7 + $0x20] sm:$0xff]
    %v135 = vld [vmem:[#allocation7 + $0x28] sm:$0xff]
    %v136 = vld [vmem:[#allocation7 + $0x30] sm:$0xff]
    %v137 = vld [vmem:[#allocation7 + $0x38] sm:$0xff]
    %v138 = vld [vmem:[#allocation7 + $0x40] sm:$0xff]
    %v139 = vld [vmem:[#allocation7 + $0x48] sm:$0xff]
    %v140 = vld [vmem:[#allocation7 + $0x50] sm:$0xff]
    %v141 = vld [vmem:[#allocation7 + $0x58] sm:$0xff]
    %v142 = vld [vmem:[#allocation7 + $0x60] sm:$0xff]
    %v143 = vld [vmem:[#allocation7 + $0x68] sm:$0xff]
    %v144 = vld [vmem:[#allocation7 + $0x70] sm:$0xff]
    %v145 = vld [vmem:[#allocation7 + $0x78] sm:$0xff]
    %v146 = vld [vmem:[%s4] sm:$0x1]
    %147 = vmatpush.msra.mxu0 %v145
    %148 = vmatpush.msra.mxu0 %v144
    %149 = vmatpush.msra.mxu0 %v143
    %150 = vmatpush.msra.mxu0 %v142
    %151 = vmatpush.msra.mxu0 %v141
    %152 = vmatpush.msra.mxu0 %v140
    %153 = vmatpush.msra.mxu0 %v139
    %154 = vmatpush.msra.mxu0 %v138
    %155 = vmatpush.msra.mxu0 %v137
    %156 = vmatpush.msra.mxu0 %v136
    %157 = vmatpush.msra.mxu0 %v135
    %158 = vmatpush.msra.mxu0 %v134
    %159 = vmatpush.msra.mxu0 %v133
    %160 = vmatpush.msra.mxu0 %v132
    %161 = vmatpush.msra.mxu0 %v131
    %162 = vmatpush.msra.mxu0 %v130
    %163 = vmatmul.f32.gmra.mxu0 %v129
    %v164 = vpop.f32.mrf.mxu0
    %v165 = vadd.f32 %v146, %v164
    %166 = vdwg.mxu0
    %vm167 = vcmask 1040384
    %v168 = vsel %vm167, %v165, -inf
    %169 = vmax.xlane.f32.xlu0 %v168
    %v170 = vpop.xlane.xlu0 %169
    %v171 = vsub.f32 %v165, %v170
    %v172 = vmul.f32 %v171, 1.442695
    %v173 = vpow.pop %v172
    %v174 = vsel %vm167, %v173, 0.0
    %175 = vadd.xlane.f32.xlu0 %v174
    %v176 = vpop.xlane.xlu0 %175
    %v177 = vlog2.pop %v176
    %v178 = vmul.f32 %v177, 0.6931472
    %v179 = vsub.f32 %v171, %v178
    %180 = vst [vmem:[#allocation9] sm:$0x1] %v179
    // Predicated region
    $region34: #{_cbow_call.1} parent=1 // pred_check
      _
    $region35: #{_cbow_call.1} parent=1 // pred_check_branch
      %182 = sbr.rel (0) target = $region37
    $region36: #{_cbow_call.1} parent=1 // pred_region
      %184 = vsyncadd [#allocation4], 0
      %s186 = sshll.u32 [#allocation9], 4
      %s187 = int_to_ptr.vmem [resolvable:$true] %s186
      %s188 = sshll.u32 %s5, 4
      %s189 = int_to_ptr.hbm [resolvable:$true] %s188
      %191 = dma.vmem_to_hbm [thread:$0]  %s187, 16, %s189, [#allocation4]
    $region37: #{_cbow_call.1} parent=1 // pred_fallthru
      _
    // Predicated region
    $region38: #{_cbow_call.1} parent=1 // pred_check
      _
    $region39: #{_cbow_call.1} parent=1 // pred_check_branch
      %193 = sbr.rel (0) target = $region41
    $region40: #{_cbow_call.1} parent=1 // pred_region
      %195 = dma.done [#allocation4], 16
    $region41: #{_cbow_call.1} parent=1 // pred_fallthru
      _
    %196 = vsyncpa [#allocation3], 1
    %197 = vsyncpa [#allocation8], 1
    %198 = vsyncpa [#allocation4], 1
    %199 = vsyncpa [#allocation5], 1

</llo_original>
